<compile_context>
chip_gen: v6e
topology: v6e:2x2x1
jax: 0.10.0
libtpu: 0.0.40
codegen_flags: <defaults>
</compile_context>

<pallas_src>
import functools
import math

import jax
import jax.numpy as jnp
from jax.experimental import pallas as pl
from jax.experimental.pallas import tpu as pltpu


def _gradient_loss_kernel(p_ref, t_ref, *out_refs,
                          x_flag, y_flag, bsz, nc_total, need_mask):
    # p_ref / t_ref: (bsz, H, W) block of stacked N*C planes, input dtype.
    d = p_ref[...].astype(jnp.float32) - t_ref[...].astype(jnp.float32)

    if need_mask:
        # The tail block reads past the end of the (NC, H, W) array; the padded
        # planes hold undefined data.  Zero their contribution (jnp.where drops
        # NaN/Inf garbage regardless of value).
        valid = nc_total - pl.program_id(0) * bsz          # scalar; >= bsz except tail
        plane = jax.lax.broadcasted_iota(jnp.int32, d.shape, 0)
        d = jnp.where(plane < valid, d, 0.0)

    idx = 0
    if x_flag:
        # diff along H (PyTorch dim=2); H is fully inside the block.
        ax = jnp.abs(d[:, 1:, :] - d[:, :-1, :])           # (bsz, H-1, W)
        sx = jnp.sum(ax, axis=0)                           # (H-1, W)  VPU adds over B
        sx = jnp.sum(sx, axis=0, keepdims=True)            # (1, W)    sublane reduce
        out_refs[idx][0] = sx                              # lane-dense partial sums
        idx += 1
    if y_flag:
        # diff along W (PyTorch dim=3)
        ay = jnp.abs(d[:, :, 1:] - d[:, :, :-1])           # (bsz, H, W-1)
        sy = jnp.sum(ay, axis=0)                           # (H, W-1)
        sy = jnp.sum(sy, axis=0, keepdims=True)            # (1, W-1)
        out_refs[idx][0] = sy


def gradient_loss(pred, targ, x_flag=True, y_flag=True):
    if pred.shape != targ.shape or pred.ndim != 4:
        raise ValueError(
            'pred and targ should be the same size, and its dim should be 4')
    if not (x_flag or y_flag):
        raise ValueError('x_flag or y_flag should be True')
    # PyTorch would produce NaN (mean of an empty tensor) in these cases; make
    # the failure explicit instead.
    if x_flag and pred.shape[2] < 2:
        raise ValueError('x_flag=True requires H >= 2')
    if y_flag and pred.shape[3] < 2:
        raise ValueError('y_flag=True requires W >= 2')

    N, C, H, W = pred.shape
    NC = N * C
    p = pred.reshape(NC, H, W)
    t = targ.reshape(NC, H, W)

    # ---- planes per block: target ~2 MiB of f32 working set per block ----
    # (tile-size sweeps on v6e: >=1 MiB blocks reach ~85% of the HBM roofline;
    #  per-grid-step overhead is ~0.35 us, so bigger blocks amortize it.)
    itemsize = jnp.dtype(pred.dtype).itemsize
    max_elems = (2 << 20) // 4
    bsz = max(1, min(NC, max_elems // max(H * W, 1)))
    num_blocks = -(-NC // bsz)                     # cdiv
    need_mask = (NC % bsz) != 0

    block_in_bytes = bsz * H * W * itemsize
    block_f32_bytes = bsz * H * W * 4
    # 2 inputs x 2 pipeline buffers + a handful of f32 block-sized temporaries,
    # clamped to stay inside v7x's 64 MiB physical VMEM.
    vmem_limit = int(min(64 << 20,
                         max(32 << 20,
                             4 * block_in_bytes + 6 * block_f32_bytes + (2 << 20))))

    out_shapes = []
    out_specs = []
    if x_flag:
        out_shapes.append(jax.ShapeDtypeStruct((num_blocks, 1, W), jnp.float32))
        out_specs.append(pl.BlockSpec((1, 1, W), lambda i: (i, 0, 0)))
    if y_flag:
        out_shapes.append(
            jax.ShapeDtypeStruct((num_blocks, 1, W - 1), jnp.float32))
        out_specs.append(pl.BlockSpec((1, 1, W - 1), lambda i: (i, 0, 0)))

    n_elem = NC * H * W
    flops = (1 + 3 * (int(x_flag) + int(y_flag))) * n_elem
    bytes_accessed = 2 * n_elem * itemsize + sum(
        4 * math.prod(s.shape) for s in out_shapes)
    cost = pl.CostEstimate(
        flops=flops, transcendentals=0, bytes_accessed=bytes_accessed)

    kernel = functools.partial(
        _gradient_loss_kernel, x_flag=x_flag, y_flag=y_flag,
        bsz=bsz, nc_total=NC, need_mask=need_mask)

    outs = pl.pallas_call(
        kernel,
        out_shape=tuple(out_shapes),
        grid=(num_blocks,),
        in_specs=[
            pl.BlockSpec((bsz, H, W), lambda i: (i, 0, 0)),
            pl.BlockSpec((bsz, H, W), lambda i: (i, 0, 0)),
        ],
        out_specs=tuple(out_specs),
        compiler_params=pltpu.CompilerParams(
            dimension_semantics=("parallel",),
            vmem_limit_bytes=vmem_limit,
        ),
        cost_estimate=cost,
    )(p, t)

    loss = jnp.float32(0.0)
    idx = 0
    if x_flag:
        inv_nx = 1.0 / float(NC * (H - 1) * W)
        loss = loss + jnp.sum(outs[idx]) * inv_nx
        idx += 1
    if y_flag:
        inv_ny = 1.0 / float(NC * H * (W - 1))
        loss = loss + jnp.sum(outs[idx]) * inv_ny
    return loss


def _ref_loss(pred, targ, x_flag=True, y_flag=True):
    # Pure-JAX reference mirroring the PyTorch forward.
    loss = jnp.float32(0.0)
    if x_flag:
        pgx = pred[:, :, 1:, :] - pred[:, :, :-1, :]
        tgx = targ[:, :, 1:, :] - targ[:, :, :-1, :]
        loss = loss + jnp.mean(jnp.abs(pgx - tgx))
    if y_flag:
        pgy = pred[:, :, :, 1:] - pred[:, :, :, :-1]
        tgy = targ[:, :, :, 1:] - targ[:, :, :, :-1]
        loss = loss + jnp.mean(jnp.abs(pgy - tgy))
    return loss


if __name__ == "__main__":
    key = jax.random.PRNGKey(0)
    k1, k2 = jax.random.split(key)

    # Small primary shape (single block, single grid step).
    pred = jax.random.normal(k1, (2, 4, 16, 16), jnp.float32)
    targ = jax.random.normal(k2, (2, 4, 16, 16), jnp.float32)

    loss = jax.block_until_ready(gradient_loss(pred, targ))
    ref = _ref_loss(pred, targ)
    assert jnp.allclose(loss, ref, rtol=1e-5, atol=1e-5), (loss, ref)

    # x-only / y-only paths.
    lx = jax.block_until_ready(gradient_loss(pred, targ, True, False))
    ly = jax.block_until_ready(gradient_loss(pred, targ, False, True))
    assert jnp.allclose(lx, _ref_loss(pred, targ, True, False), rtol=1e-5, atol=1e-5)
    assert jnp.allclose(ly, _ref_loss(pred, targ, False, True), rtol=1e-5, atol=1e-5)

    # Multi-block path (NC divisible by the chosen block: 4 planes/block, 2 steps).
    k3, k4 = jax.random.split(k2)
    pred2 = jax.random.normal(k3, (2, 4, 256, 512), jnp.float32)
    targ2 = jax.random.normal(k4, (2, 4, 256, 512), jnp.float32)
    loss2 = jax.block_until_ready(gradient_loss(pred2, targ2))
    ref2 = _ref_loss(pred2, targ2)
    assert jnp.allclose(loss2, ref2, rtol=1e-4, atol=1e-5), (loss2, ref2)

    # Ragged path (NC = 5 not divisible by block of 4 -> tail-block masking).
    k5, k6 = jax.random.split(k4)
    pred3 = jax.random.normal(k5, (5, 1, 256, 512), jnp.float32)
    targ3 = jax.random.normal(k6, (5, 1, 256, 512), jnp.float32)
    loss3 = jax.block_until_ready(gradient_loss(pred3, targ3))
    ref3 = _ref_loss(pred3, targ3)
    assert jnp.allclose(loss3, ref3, rtol=1e-4, atol=1e-5), (loss3, ref3)

    print("KERNEL_OK")
</pallas_src>

<mosaic_0001>
module attributes {stable_mosaic.version = 11 : i64} {
  func.func @_gradient_loss_kernel(%arg0: i32, %arg1: memref<8x16x16xf32, #tpu.memory_space<vmem>>, %arg2: memref<8x16x16xf32, #tpu.memory_space<vmem>>, %arg3: memref<1x1x16xf32, #tpu.memory_space<vmem>>, %arg4: memref<1x1x15xf32, #tpu.memory_space<vmem>>) attributes {dimension_semantics = [#tpu.dimension_semantics<parallel>], iteration_bounds = array<i64: 1>, scalar_prefetch = 0 : i64, scratch_operands = 0 : i64, tpu.core_type = #tpu.core_type<tc>, window_params = [{transform_indices = @transform_0, window_bounds = array<i64: 8, 16, 16>}, {transform_indices = @transform_1, window_bounds = array<i64: 8, 16, 16>}, {transform_indices = @transform_2, window_bounds = array<i64: 1, 1, 16>}, {transform_indices = @transform_3, window_bounds = array<i64: 1, 1, 15>}]} {
    %c0 = arith.constant 0 : index
    %c0_0 = arith.constant 0 : index
    %c0_1 = arith.constant 0 : index
    %0 = vector.load %arg1[%c0, %c0_0, %c0_1] : memref<8x16x16xf32, #tpu.memory_space<vmem>>, vector<8x16x16xf32>
    %c0_2 = arith.constant 0 : index
    %c0_3 = arith.constant 0 : index
    %c0_4 = arith.constant 0 : index
    %1 = vector.load %arg2[%c0_2, %c0_3, %c0_4] : memref<8x16x16xf32, #tpu.memory_space<vmem>>, vector<8x16x16xf32>
    %2 = arith.subf %0, %1 : vector<8x16x16xf32>
    %3 = vector.extract_strided_slice %2 {offsets = [0, 1, 0], sizes = [8, 15, 16], strides = [1, 1, 1]} : vector<8x16x16xf32> to vector<8x15x16xf32>
    %4 = vector.extract_strided_slice %2 {offsets = [0, 0, 0], sizes = [8, 15, 16], strides = [1, 1, 1]} : vector<8x16x16xf32> to vector<8x15x16xf32>
    %5 = arith.subf %3, %4 : vector<8x15x16xf32>
    %6 = math.absf %5 : vector<8x15x16xf32>
    %cst = arith.constant dense<0.000000e+00> : vector<15x16xf32>
    %7 = vector.multi_reduction <add>, %6, %cst [0] : vector<8x15x16xf32> to vector<15x16xf32>
    %cst_5 = arith.constant dense<0.000000e+00> : vector<16xf32>
    %8 = vector.multi_reduction <add>, %7, %cst_5 [0] : vector<15x16xf32> to vector<16xf32>
    %9 = vector.shape_cast %8 : vector<16xf32> to vector<1x16xf32>
    %c0_6 = arith.constant 0 : index
    %c0_7 = arith.constant 0 : index
    %c0_8 = arith.constant 0 : index
    %10 = vector.load %arg3[%c0_6, %c0_7, %c0_8] : memref<1x1x16xf32, #tpu.memory_space<vmem>>, vector<1x1x16xf32>
    %11 = vector.shape_cast %10 : vector<1x1x16xf32> to vector<1x16xf32>
    %12 = vector.shape_cast %9 : vector<1x16xf32> to vector<1x1x16xf32>
    tpu.vector_store %arg3[%c0_6, %c0_7, %c0_8], %12 {strides = array<i32>} : memref<1x1x16xf32, #tpu.memory_space<vmem>>, vector<1x1x16xf32>,
    %13 = vector.extract_strided_slice %2 {offsets = [0, 0, 1], sizes = [8, 16, 15], strides = [1, 1, 1]} : vector<8x16x16xf32> to vector<8x16x15xf32>
    %14 = vector.extract_strided_slice %2 {offsets = [0, 0, 0], sizes = [8, 16, 15], strides = [1, 1, 1]} : vector<8x16x16xf32> to vector<8x16x15xf32>
    %15 = arith.subf %13, %14 : vector<8x16x15xf32>
    %16 = math.absf %15 : vector<8x16x15xf32>
    %cst_9 = arith.constant dense<0.000000e+00> : vector<16x15xf32>
    %17 = vector.multi_reduction <add>, %16, %cst_9 [0] : vector<8x16x15xf32> to vector<16x15xf32>
    %cst_10 = arith.constant dense<0.000000e+00> : vector<15xf32>
    %18 = vector.multi_reduction <add>, %17, %cst_10 [0] : vector<16x15xf32> to vector<15xf32>
    %19 = vector.shape_cast %18 : vector<15xf32> to vector<1x15xf32>
    %c0_11 = arith.constant 0 : index
    %c0_12 = arith.constant 0 : index
    %c0_13 = arith.constant 0 : index
    %20 = vector.load %arg4[%c0_11, %c0_12, %c0_13] : memref<1x1x15xf32, #tpu.memory_space<vmem>>, vector<1x1x15xf32>
    %21 = vector.shape_cast %20 : vector<1x1x15xf32> to vector<1x15xf32>
    %22 = vector.shape_cast %19 : vector<1x15xf32> to vector<1x1x15xf32>
    tpu.vector_store %arg4[%c0_11, %c0_12, %c0_13], %22 {strides = array<i32>} : memref<1x1x15xf32, #tpu.memory_space<vmem>>, vector<1x1x15xf32>,
    return
  }
  func.func @transform_0(%arg0: i32) -> (i32, i32, i32) {
    %c0_i32 = arith.constant 0 : i32
    %c0_i32_0 = arith.constant 0 : i32
    %c0_i32_1 = arith.constant 0 : i32
    return %arg0, %c0_i32, %c0_i32_0 : i32, i32, i32
  }
  func.func @transform_1(%arg0: i32) -> (i32, i32, i32) {
    %c0_i32 = arith.constant 0 : i32
    %c0_i32_0 = arith.constant 0 : i32
    %c0_i32_1 = arith.constant 0 : i32
    return %arg0, %c0_i32, %c0_i32_0 : i32, i32, i32
  }
  func.func @transform_2(%arg0: i32) -> (i32, i32, i32) {
    %c0_i32 = arith.constant 0 : i32
    %c0_i32_0 = arith.constant 0 : i32
    %c0_i32_1 = arith.constant 0 : i32
    return %arg0, %c0_i32, %c0_i32_0 : i32, i32, i32
  }
  func.func @transform_3(%arg0: i32) -> (i32, i32, i32) {
    %c0_i32 = arith.constant 0 : i32
    %c0_i32_0 = arith.constant 0 : i32
    %c0_i32_1 = arith.constant 0 : i32
    return %arg0, %c0_i32, %c0_i32_0 : i32, i32, i32
  }
}

</mosaic_0001>

<llo_original>
// kernel: tpu_custom_call.1
$region0: #{tpu_custom_call.1}
  #allocation0 [shape = 'u32[]', space=smem, size = 0x4, offset = 0x4, fixed_abs, tag = 'smem constant byte address 0x4 - core index']
  #allocation1 [shape = 'u32[144,128]{1,0:T(1,128)}', space=vmem, size = 0x12000, scoped, tag = 'internal scratch']
  %s0 = inlined_call_operand.hbm [shape: f32[8,16,16], index: 0, kind: input, shape index: {}]
  %s1 = inlined_call_operand.hbm [shape: f32[8,16,16], index: 1, kind: input, shape index: {}]
  %s2 = inlined_call_operand.hbm [shape: f32[1,1,16], index: 2, kind: output, shape index: {0}]
  %s3 = inlined_call_operand.hbm [shape: f32[1,1,15], index: 3, kind: output, shape index: {1}]
  %4 = xla_tuple %s2, %s3
  %s5 = sld [smem:[#allocation0]]
  $region34: #{tpu_custom_call.1} parent=0
    _
  %s7 = ssub.s32 1, %s5
  %s8 = scalar_select 0, %s7, %s5
  $region1: #{tpu_custom_call.1} parent=0
    #allocation2 [shape = 'u8[65536]{0}', space=vmem, size = 0x10000, scoped, tag = 'input window, operand 0, single buffered']
    #allocation3 [shape = 's32[1]{0}', space=sflag, size = 0x4, scoped, tag = 'scoped memory for tpu_custom_call.1']
    #allocation4 [shape = 's32[1]{0}', space=sflag, size = 0x4, scoped, tag = 'scoped memory for tpu_custom_call.1']
    #allocation5 [shape = 'u8[65536]{0}', space=vmem, size = 0x10000, scoped, tag = 'input window, operand 1, single buffered']
    #allocation6 [shape = 's32[1]{0}', space=sflag, size = 0x4, scoped, tag = 'scoped memory for tpu_custom_call.1']
    #allocation7 [shape = 'u8[512]{0}', space=vmem, size = 0x400, scoped, tag = 'output window, operand 0, single buffered']
    #allocation8 [shape = 'u8[512]{0}', space=vmem, size = 0x400, scoped, tag = 'output window, operand 1, single buffered']
    #allocation9 [shape = 's32[1]{0}', space=sflag, size = 0x4, scoped, tag = 'scoped memory for tpu_custom_call.1']
    %9 = vsyncpa [#allocation3], 0
    %10 = vsyncpa [#allocation6], 0
    %11 = vsyncpa [#allocation4], 0
    %12 = vsyncpa [#allocation9], 0
    // Predicated region
    $region2: #{tpu_custom_call.1} parent=1 // pred_check
      _
    $region3: #{tpu_custom_call.1} parent=1 // pred_check_branch
      %14 = sbr.rel (0) target = $region5
    $region4: #{tpu_custom_call.1} parent=1 // pred_region
      %s16 = ssub.s32 2048, 2048
      %17 = vsyncadd [#allocation3], %s16
      %s18 = sshll.u32 [#allocation2], 4
      %s19 = int_to_ptr.vmem [resolvable:$true] %s18
      %24 = dma.hbm_to_vmem [thread:$0]  %s0, 2048, %s19, [#allocation3], 128, 128, 8
    $region5: #{tpu_custom_call.1} parent=1 // pred_fallthru
      _
    // Predicated region
    $region6: #{tpu_custom_call.1} parent=1 // pred_check
      _
    $region7: #{tpu_custom_call.1} parent=1 // pred_check_branch
      %26 = sbr.rel (0) target = $region9
    $region8: #{tpu_custom_call.1} parent=1 // pred_region
      %s28 = ssub.s32 2048, 2048
      %29 = vsyncadd [#allocation6], %s28
      %s30 = sshll.u32 [#allocation5], 4
      %s31 = int_to_ptr.vmem [resolvable:$true] %s30
      %36 = dma.hbm_to_vmem [thread:$0]  %s1, 2048, %s31, [#allocation6], 128, 128, 8
    $region9: #{tpu_custom_call.1} parent=1 // pred_fallthru
      _
    // Predicated region
    $region10: #{tpu_custom_call.1} parent=1 // pred_check
      _
    $region11: #{tpu_custom_call.1} parent=1 // pred_check_branch
      %38 = sbr.rel (0) target = $region13
    $region12: #{tpu_custom_call.1} parent=1 // pred_region
      %39 = dma.done [#allocation3], 2048
    $region13: #{tpu_custom_call.1} parent=1 // pred_fallthru
      _
    // Predicated region
    $region14: #{tpu_custom_call.1} parent=1 // pred_check
      _
    $region15: #{tpu_custom_call.1} parent=1 // pred_check_branch
      %41 = sbr.rel (0) target = $region17
    $region16: #{tpu_custom_call.1} parent=1 // pred_region
      %42 = dma.done [#allocation6], 2048
    $region17: #{tpu_custom_call.1} parent=1 // pred_fallthru
      _
    %v43 = vld [vmem:[#allocation2] sm:$0xff]
    %v44 = vld [vmem:[#allocation2 + $0x8] sm:$0xff]
    %v45 = vld [vmem:[#allocation2 + $0x10] sm:$0xff]
    %v46 = vld [vmem:[#allocation2 + $0x18] sm:$0xff]
    %v47 = vld [vmem:[#allocation2 + $0x20] sm:$0xff]
    %v48 = vld [vmem:[#allocation2 + $0x28] sm:$0xff]
    %v49 = vld [vmem:[#allocation2 + $0x30] sm:$0xff]
    %v50 = vld [vmem:[#allocation2 + $0x38] sm:$0xff]
    %v51 = vld [vmem:[#allocation2 + $0x40] sm:$0xff]
    %v52 = vld [vmem:[#allocation2 + $0x48] sm:$0xff]
    %v53 = vld [vmem:[#allocation2 + $0x50] sm:$0xff]
    %v54 = vld [vmem:[#allocation2 + $0x58] sm:$0xff]
    %v55 = vld [vmem:[#allocation2 + $0x60] sm:$0xff]
    %v56 = vld [vmem:[#allocation2 + $0x68] sm:$0xff]
    %v57 = vld [vmem:[#allocation2 + $0x70] sm:$0xff]
    %v58 = vld [vmem:[#allocation2 + $0x78] sm:$0xff]
    %v59 = vld [vmem:[#allocation5] sm:$0xff]
    %v60 = vld [vmem:[#allocation5 + $0x8] sm:$0xff]
    %v61 = vld [vmem:[#allocation5 + $0x10] sm:$0xff]
    %v62 = vld [vmem:[#allocation5 + $0x18] sm:$0xff]
    %v63 = vld [vmem:[#allocation5 + $0x20] sm:$0xff]
    %v64 = vld [vmem:[#allocation5 + $0x28] sm:$0xff]
    %v65 = vld [vmem:[#allocation5 + $0x30] sm:$0xff]
    %v66 = vld [vmem:[#allocation5 + $0x38] sm:$0xff]
    %v67 = vld [vmem:[#allocation5 + $0x40] sm:$0xff]
    %v68 = vld [vmem:[#allocation5 + $0x48] sm:$0xff]
    %v69 = vld [vmem:[#allocation5 + $0x50] sm:$0xff]
    %v70 = vld [vmem:[#allocation5 + $0x58] sm:$0xff]
    %v71 = vld [vmem:[#allocation5 + $0x60] sm:$0xff]
    %v72 = vld [vmem:[#allocation5 + $0x68] sm:$0xff]
    %v73 = vld [vmem:[#allocation5 + $0x70] sm:$0xff]
    %v74 = vld [vmem:[#allocation5 + $0x78] sm:$0xff]
    %v75 = vsub.f32 %v43, %v59
    %v76 = vsub.f32 %v44, %v60
    %v77 = vsub.f32 %v45, %v61
    %v78 = vsub.f32 %v46, %v62
    %v79 = vsub.f32 %v47, %v63
    %v80 = vsub.f32 %v48, %v64
    %v81 = vsub.f32 %v49, %v65
    %v82 = vsub.f32 %v50, %v66
    %v83 = vsub.f32 %v51, %v67
    %v84 = vsub.f32 %v52, %v68
    %v85 = vsub.f32 %v53, %v69
    %v86 = vsub.f32 %v54, %v70
    %v87 = vsub.f32 %v55, %v71
    %v88 = vsub.f32 %v56, %v72
    %v89 = vsub.f32 %v57, %v73
    %v90 = vsub.f32 %v58, %v74
    %vm107 = vcmask 1040384
    %v108 = vrot.slane %v75, 7
    %v109 = vrot.slane %v76, 7
    %v110 = vsel %vm107, %v108, %v109
    %v111 = vrot.slane %v77, 7
    %v112 = vrot.slane %v78, 7
    %v113 = vsel %vm107, %v111, %v112
    %v114 = vrot.slane %v79, 7
    %v115 = vrot.slane %v80, 7
    %v116 = vsel %vm107, %v114, %v115
    %v117 = vrot.slane %v81, 7
    %v118 = vrot.slane %v82, 7
    %v119 = vsel %vm107, %v117, %v118
    %v120 = vrot.slane %v83, 7
    %v121 = vrot.slane %v84, 7
    %v122 = vsel %vm107, %v120, %v121
    %v123 = vrot.slane %v85, 7
    %v124 = vrot.slane %v86, 7
    %v125 = vsel %vm107, %v123, %v124
    %v126 = vrot.slane %v87, 7
    %v127 = vrot.slane %v88, 7
    %v128 = vsel %vm107, %v126, %v127
    %v129 = vrot.slane %v89, 7
    %v130 = vrot.slane %v90, 7
    %v131 = vsel %vm107, %v129, %v130
    %v148 = vsub.f32 %v75, %v108
    %v149 = vsub.f32 %v76, %v110
    %v150 = vsub.f32 %v77, %v111
    %v151 = vsub.f32 %v78, %v113
    %v152 = vsub.f32 %v79, %v114
    %v153 = vsub.f32 %v80, %v116
    %v154 = vsub.f32 %v81, %v117
    %v155 = vsub.f32 %v82, %v119
    %v156 = vsub.f32 %v83, %v120
    %v157 = vsub.f32 %v84, %v122
    %v158 = vsub.f32 %v85, %v123
    %v159 = vsub.f32 %v86, %v125
    %v160 = vsub.f32 %v87, %v126
    %v161 = vsub.f32 %v88, %v128
    %v162 = vsub.f32 %v89, %v129
    %v163 = vsub.f32 %v90, %v131
    %v164 = vand.u32 2147483647, %v148
    %v165 = vand.u32 2147483647, %v149
    %v166 = vand.u32 2147483647, %v150
    %v167 = vand.u32 2147483647, %v151
    %v168 = vand.u32 2147483647, %v152
    %v169 = vand.u32 2147483647, %v153
    %v170 = vand.u32 2147483647, %v154
    %v171 = vand.u32 2147483647, %v155
    %v172 = vand.u32 2147483647, %v156
    %v173 = vand.u32 2147483647, %v157
    %v174 = vand.u32 2147483647, %v158
    %v175 = vand.u32 2147483647, %v159
    %v176 = vand.u32 2147483647, %v160
    %v177 = vand.u32 2147483647, %v161
    %v178 = vand.u32 2147483647, %v162
    %v179 = vand.u32 2147483647, %v163
    %vm180 = vcmask 130049
    %v181 = vsel %vm180, %v164, 0.0
    %v182 = vsel %vm180, %v166, 0.0
    %v183 = vadd.f32 %v181, %v182
    %v184 = vsel %vm180, %v168, 0.0
    %v185 = vadd.f32 %v183, %v184
    %v186 = vsel %vm180, %v170, 0.0
    %v187 = vadd.f32 %v185, %v186
    %v188 = vsel %vm180, %v172, 0.0
    %v189 = vadd.f32 %v187, %v188
    %v190 = vsel %vm180, %v174, 0.0
    %v191 = vadd.f32 %v189, %v190
    %v192 = vsel %vm180, %v176, 0.0
    %v193 = vadd.f32 %v191, %v192
    %v194 = vsel %vm180, %v178, 0.0
    %v195 = vadd.f32 %v193, %v194
    %vm196 = vcmask 130048
    %v197 = vsel %vm196, %v165, 0.0
    %v198 = vsel %vm196, %v167, 0.0
    %v199 = vadd.f32 %v197, %v198
    %v200 = vsel %vm196, %v169, 0.0
    %v201 = vadd.f32 %v199, %v200
    %v202 = vsel %vm196, %v171, 0.0
    %v203 = vadd.f32 %v201, %v202
    %v204 = vsel %vm196, %v173, 0.0
    %v205 = vadd.f32 %v203, %v204
    %v206 = vsel %vm196, %v175, 0.0
    %v207 = vadd.f32 %v205, %v206
    %v208 = vsel %vm196, %v177, 0.0
    %v209 = vadd.f32 %v207, %v208
    %v210 = vsel %vm196, %v179, 0.0
    %v211 = vadd.f32 %v209, %v210
    %vm214 = vcmask 1046528
    %v215 = vrot.slane %v195, 1
    %v216 = vrot.slane %v211, 1
    %v217 = vsel %vm214, %v215, %v216
    %v220 = vsel %vm196, %v217, 0.0
    %vm221 = vcmask 129024
    %v222 = vsel %vm221, %v216, 0.0
    %v223 = vadd.f32 %v220, %v222
    %v224 = vrot.slane %v223, 4
    %v225 = vadd.f32 %v223, %v224
    %v226 = vrot.slane %v225, 2
    %v227 = vadd.f32 %v225, %v226
    %v228 = vrot.slane %v227, 1
    %v229 = vadd.f32 %v227, %v228
    %vm230 = vcmask 122880
    %231 = vst.msk [vmem:[#allocation7] sm:$0x1] %vm230, %v229
    %232 = vrot.lane.b32.xlu0 %v75, 1
    %v233 = vpop.permute.xlu0 %232
    %234 = vrot.lane.b32.xlu0 %v76, 1
    %v235 = vpop.permute.xlu0 %234
    %236 = vrot.lane.b32.xlu0 %v77, 1
    %v237 = vpop.permute.xlu0 %236
    %238 = vrot.lane.b32.xlu0 %v78, 1
    %v239 = vpop.permute.xlu0 %238
    %240 = vrot.lane.b32.xlu0 %v79, 1
    %v241 = vpop.permute.xlu0 %240
    %242 = vrot.lane.b32.xlu0 %v80, 1
    %v243 = vpop.permute.xlu0 %242
    %244 = vrot.lane.b32.xlu0 %v81, 1
    %v245 = vpop.permute.xlu0 %244
    %246 = vrot.lane.b32.xlu0 %v82, 1
    %v247 = vpop.permute.xlu0 %246
    %248 = vrot.lane.b32.xlu0 %v83, 1
    %v249 = vpop.permute.xlu0 %248
    %250 = vrot.lane.b32.xlu0 %v84, 1
    %v251 = vpop.permute.xlu0 %250
    %252 = vrot.lane.b32.xlu0 %v85, 1
    %v253 = vpop.permute.xlu0 %252
    %254 = vrot.lane.b32.xlu0 %v86, 1
    %v255 = vpop.permute.xlu0 %254
    %256 = vrot.lane.b32.xlu0 %v87, 1
    %v257 = vpop.permute.xlu0 %256
    %258 = vrot.lane.b32.xlu0 %v88, 1
    %v259 = vpop.permute.xlu0 %258
    %260 = vrot.lane.b32.xlu0 %v89, 1
    %v261 = vpop.permute.xlu0 %260
    %262 = vrot.lane.b32.xlu0 %v90, 1
    %v263 = vpop.permute.xlu0 %262
    %v280 = vsub.f32 %v75, %v233
    %v281 = vsub.f32 %v76, %v235
    %v282 = vsub.f32 %v77, %v237
    %v283 = vsub.f32 %v78, %v239
    %v284 = vsub.f32 %v79, %v241
    %v285 = vsub.f32 %v80, %v243
    %v286 = vsub.f32 %v81, %v245
    %v287 = vsub.f32 %v82, %v247
    %v288 = vsub.f32 %v83, %v249
    %v289 = vsub.f32 %v84, %v251
    %v290 = vsub.f32 %v85, %v253
    %v291 = vsub.f32 %v86, %v255
    %v292 = vsub.f32 %v87, %v257
    %v293 = vsub.f32 %v88, %v259
    %v294 = vsub.f32 %v89, %v261
    %v295 = vsub.f32 %v90, %v263
    %v296 = vand.u32 2147483647, %v280
    %v297 = vand.u32 2147483647, %v281
    %v298 = vand.u32 2147483647, %v282
    %v299 = vand.u32 2147483647, %v283
    %v300 = vand.u32 2147483647, %v284
    %v301 = vand.u32 2147483647, %v285
    %v302 = vand.u32 2147483647, %v286
    %v303 = vand.u32 2147483647, %v287
    %v304 = vand.u32 2147483647, %v288
    %v305 = vand.u32 2147483647, %v289
    %v306 = vand.u32 2147483647, %v290
    %v307 = vand.u32 2147483647, %v291
    %v308 = vand.u32 2147483647, %v292
    %v309 = vand.u32 2147483647, %v293
    %v310 = vand.u32 2147483647, %v294
    %v311 = vand.u32 2147483647, %v295
    %vm312 = vcmask 130056
    %v313 = vsel %vm312, %v296, 0.0
    %v314 = vsel %vm312, %v298, 0.0
    %v315 = vadd.f32 %v313, %v314
    %v316 = vsel %vm312, %v300, 0.0
    %v317 = vadd.f32 %v315, %v316
    %v318 = vsel %vm312, %v302, 0.0
    %v319 = vadd.f32 %v317, %v318
    %v320 = vsel %vm312, %v304, 0.0
    %v321 = vadd.f32 %v319, %v320
    %v322 = vsel %vm312, %v306, 0.0
    %v323 = vadd.f32 %v321, %v322
    %v324 = vsel %vm312, %v308, 0.0
    %v325 = vadd.f32 %v323, %v324
    %v326 = vsel %vm312, %v310, 0.0
    %v327 = vadd.f32 %v325, %v326
    %v328 = vsel %vm312, %v297, 0.0
    %v329 = vsel %vm312, %v299, 0.0
    %v330 = vadd.f32 %v328, %v329
    %v331 = vsel %vm312, %v301, 0.0
    %v332 = vadd.f32 %v330, %v331
    %v333 = vsel %vm312, %v303, 0.0
    %v334 = vadd.f32 %v332, %v333
    %v335 = vsel %vm312, %v305, 0.0
    %v336 = vadd.f32 %v334, %v335
    %v337 = vsel %vm312, %v307, 0.0
    %v338 = vadd.f32 %v336, %v337
    %v339 = vsel %vm312, %v309, 0.0
    %v340 = vadd.f32 %v338, %v339
    %v341 = vsel %vm312, %v311, 0.0
    %v342 = vadd.f32 %v340, %v341
    %v343 = vsel %vm312, %v327, 0.0
    %v344 = vsel %vm312, %v342, 0.0
    %v345 = vadd.f32 %v343, %v344
    %v346 = vrot.slane %v345, 4
    %v347 = vadd.f32 %v345, %v346
    %v348 = vrot.slane %v347, 2
    %v349 = vadd.f32 %v347, %v348
    %v350 = vrot.slane %v349, 1
    %v351 = vadd.f32 %v349, %v350
    %353 = vrot.lane.b32.xlu0 %v351, 127
    %v354 = vpop.permute.xlu0 %353
    %vm356 = vcmask 114688
    %357 = vst.msk [vmem:[#allocation8] sm:$0x1] %vm356, %v354
    // Predicated region
    $region18: #{tpu_custom_call.1} parent=1 // pred_check
      _
    $region19: #{tpu_custom_call.1} parent=1 // pred_check_branch
      %359 = sbr.rel (0) target = $region21
    $region20: #{tpu_custom_call.1} parent=1 // pred_region
      %s361 = ssub.s32 16, 16
      %362 = vsyncadd [#allocation4], %s361
      %s364 = sshll.u32 [#allocation7], 4
      %s365 = int_to_ptr.vmem [resolvable:$true] %s364
      %367 = dma.vmem_to_hbm [thread:$0]  %s365, 16, %s2, [#allocation4]
    $region21: #{tpu_custom_call.1} parent=1 // pred_fallthru
      _
    // Predicated region
    $region22: #{tpu_custom_call.1} parent=1 // pred_check
      _
    $region23: #{tpu_custom_call.1} parent=1 // pred_check_branch
      %369 = sbr.rel (0) target = $region25
    $region24: #{tpu_custom_call.1} parent=1 // pred_region
      %s371 = ssub.s32 16, 16
      %372 = vsyncadd [#allocation9], %s371
      %s374 = sshll.u32 [#allocation8], 4
      %s375 = int_to_ptr.vmem [resolvable:$true] %s374
      %377 = dma.vmem_to_hbm [thread:$0]  %s375, 16, %s3, [#allocation9]
    $region25: #{tpu_custom_call.1} parent=1 // pred_fallthru
      _
    // Predicated region
    $region26: #{tpu_custom_call.1} parent=1 // pred_check
      _
    $region27: #{tpu_custom_call.1} parent=1 // pred_check_branch
      %379 = sbr.rel (0) target = $region29
    $region28: #{tpu_custom_call.1} parent=1 // pred_region
      %380 = dma.done [#allocation4], 16
    $region29: #{tpu_custom_call.1} parent=1 // pred_fallthru
      _
    // Predicated region
    $region30: #{tpu_custom_call.1} parent=1 // pred_check
      _
    $region31: #{tpu_custom_call.1} parent=1 // pred_check_branch
      %382 = sbr.rel (0) target = $region33
    $region32: #{tpu_custom_call.1} parent=1 // pred_region
      %383 = dma.done [#allocation9], 16
    $region33: #{tpu_custom_call.1} parent=1 // pred_fallthru
      _
    %384 = vsyncpa [#allocation3], 1
    %385 = vsyncpa [#allocation6], 1
    %386 = vsyncpa [#allocation4], 1
    %387 = vsyncpa [#allocation9], 1

</llo_original>
